<compile_context>
chip_gen: v5e
topology: v5e:2x2
jax: 0.10.0
libtpu: 0.0.40
codegen_flags: <defaults>
</compile_context>

<pallas_src>
import jax
import jax.numpy as jnp
from jax.experimental import pallas as pl
from jax.experimental.pallas import tpu as pltpu


def _round_up(a, b):
    return ((a + b - 1) // b) * b


# ----------------------------- Pallas kernel --------------------------------

def _up_conv1x1_kernel(x_ref, w_ref, b_ref, o_ref):
    # x_ref: (Cin, tn) in the caller's dtype (f32 here) -> cast to bf16 on the VPU
    # w_ref: (Cout, Cin) bf16      b_ref: (Cout, 1) f32      o_ref: (Cout, tn)
    x_bf = x_ref[...].astype(jnp.bfloat16)
    acc = jnp.dot(w_ref[...], x_bf, preferred_element_type=jnp.float32)
    o_ref[...] = (acc + b_ref[...]).astype(o_ref.dtype)


def conv1x1_nchw_pallas(x_bcm, weight_oc, bias, *, tn_max=8192,
                        conv_out_dtype=jnp.bfloat16):
    """Per-pixel channel contraction in NCHW-friendly (Cin, M) layout.

    x_bcm:     (B, Cin, M)  activations, passed in their native dtype
                            (cast to bf16 inside the kernel, right before the dot)
    weight_oc: (Cout, Cin)  1x1-conv weight (PyTorch orientation, squeezed)
    bias:      (Cout,)
    returns    (B, Cout, M) in conv_out_dtype
    """
    B, Cin, M = x_bcm.shape
    Cout = weight_oc.shape[0]

    # Lane tile: multiple of 128 (or the full spatial dim), as large as possible.
    # No padding: Pallas masks the ragged last tile when tn does not divide M.
    tn = min(tn_max, _round_up(M, 128))
    if B == 1 and M > 128:
        # Keep >= 2 spatial tiles so a single-batch call still feeds both v7x TCs.
        tn = min(tn, max(128, _round_up(pl.cdiv(M, 2), 128)))
    num_tiles = pl.cdiv(M, tn)

    w_bf = weight_oc.astype(jnp.bfloat16)            # tiny (Cout, Cin) one-off cast
    b2d = bias.astype(jnp.float32).reshape(Cout, 1)

    grid = (B, num_tiles)

    out = pl.pallas_call(
        _up_conv1x1_kernel,
        out_shape=jax.ShapeDtypeStruct((B, Cout, M), conv_out_dtype),
        grid_spec=pltpu.PrefetchScalarGridSpec(
            num_scalar_prefetch=0,
            grid=grid,
            in_specs=[
                # activations: squeeze the batch dim, (Cin, tn) tile, native dtype
                pl.BlockSpec((None, Cin, tn), lambda b, j: (b, 0, j)),
                # weight / bias: constant index_map -> resident across the grid
                pl.BlockSpec((Cout, Cin), lambda b, j: (0, 0)),
                pl.BlockSpec((Cout, 1), lambda b, j: (0, 0)),
            ],
            out_specs=pl.BlockSpec((None, Cout, tn), lambda b, j: (b, 0, j)),
        ),
        compiler_params=pltpu.CompilerParams(
            dimension_semantics=("parallel", "parallel")),
    )(x_bcm, w_bf, b2d)

    return out


# ------------------------------- UP forward ---------------------------------

def pixel_shuffle(x, r):
    """NCHW pixel shuffle: (B, C*r*r, H, W) -> (B, C, H*r, W*r)."""
    B, Crr, H, W = x.shape
    C = Crr // (r * r)
    x = x.reshape(B, C, r, r, H, W)
    x = jnp.transpose(x, (0, 1, 4, 2, 5, 3))  # (B, C, H, r, W, r)
    return x.reshape(B, C, H * r, W * r)


def up_forward(x_nchw, weight, bias, *, patch_size=4, out_chans=3):
    """UP.forward.  x_nchw: (B, embed_dim, H, W) -> (B, out_chans, H*p, W*p).

    weight: (out_chans*patch_size**2, embed_dim)   (PyTorch Conv2d weight, squeezed)
    bias:   (out_chans*patch_size**2,)
    """
    B, Cin, H, W = x_nchw.shape
    Cout = out_chans * patch_size ** 2
    x_bcm = x_nchw.reshape(B, Cin, H * W)            # pure reshape, no copy
    y = conv1x1_nchw_pallas(x_bcm, weight, bias)     # (B, Cout, H*W) bf16
    y = y.reshape(B, Cout, H, W)
    # Final cast back to the input dtype fuses into the pixel-shuffle transpose.
    return pixel_shuffle(y, patch_size).astype(x_nchw.dtype)


# --------------------------------- driver ------------------------------------

if __name__ == "__main__":
    patch_size = 4
    out_chans = 3
    embed_dim = 96
    B, H, W = 2, 16, 16
    Cout = out_chans * patch_size ** 2  # 48

    key = jax.random.PRNGKey(0)
    kx, kw, kb = jax.random.split(key, 3)

    x = jax.random.normal(kx, (B, embed_dim, H, W), dtype=jnp.float32)
    # Deterministic "kaiming-ish" init for the 1x1 conv (fan_in = embed_dim),
    # weight stored in PyTorch orientation (Cout, Cin).
    weight = jax.random.normal(kw, (Cout, embed_dim), dtype=jnp.float32) * (
        1.0 / jnp.sqrt(jnp.float32(embed_dim)))
    bias = jax.random.normal(kb, (Cout,), dtype=jnp.float32) * 0.01

    fwd = jax.jit(up_forward, static_argnames=("patch_size", "out_chans"))
    out = fwd(x, weight, bias, patch_size=patch_size, out_chans=out_chans)
    out = jax.block_until_ready(out)

    # sanity: expected output shape (B, out_chans, H*p, W*p)
    assert out.shape == (B, out_chans, H * patch_size, W * patch_size), out.shape

    # Reference: bf16-rounded inputs, f32 accumulation, then bf16-round the conv
    # output (matching the kernel's bf16 intermediate), then pixel shuffle.
    x_bf = x.astype(jnp.bfloat16).astype(jnp.float32)
    w_bf = weight.astype(jnp.bfloat16).astype(jnp.float32)
    ref = jnp.einsum("bchw,oc->bohw", x_bf, w_bf,
                     precision=jax.lax.Precision.HIGHEST)
    ref = ref + bias[None, :, None, None]
    ref = ref.astype(jnp.bfloat16).astype(jnp.float32)
    ref = pixel_shuffle(ref, patch_size)
    # Tolerance covers <=1 bf16 ulp from MXU vs einsum accumulation order.
    assert jnp.allclose(out, ref, atol=2e-2, rtol=2e-2), (
        float(jnp.max(jnp.abs(out - ref))))

    print("KERNEL_OK")
</pallas_src>

<mosaic_0001>
module attributes {stable_mosaic.version = 11 : i64} {
  func.func @_up_conv1x1_kernel(%arg0: i32, %arg1: i32, %arg2: memref<1x96x256xf32, #tpu.memory_space<vmem>>, %arg3: memref<48x96xbf16, #tpu.memory_space<vmem>>, %arg4: memref<48x1xf32, #tpu.memory_space<vmem>>, %arg5: memref<1x48x256xbf16, #tpu.memory_space<vmem>>) attributes {dimension_semantics = [#tpu.dimension_semantics<parallel>, #tpu.dimension_semantics<parallel>], iteration_bounds = array<i64: 2, 1>, scalar_prefetch = 0 : i64, scratch_operands = 0 : i64, tpu.core_type = #tpu.core_type<tc>, window_params = [{transform_indices = @transform_0, window_bounds = array<i64: 1, 96, 256>}, {pipeline_mode = #tpu.pipeline_mode<synchronous>, transform_indices = @transform_1, window_bounds = array<i64: 48, 96>}, {pipeline_mode = #tpu.pipeline_mode<synchronous>, transform_indices = @transform_2, window_bounds = array<i64: 48, 1>}, {transform_indices = @transform_3, window_bounds = array<i64: 1, 48, 256>}]} {
    %c0 = arith.constant 0 : index
    %c0_0 = arith.constant 0 : index
    %c0_1 = arith.constant 0 : index
    %0 = vector.load %arg2[%c0, %c0_0, %c0_1] : memref<1x96x256xf32, #tpu.memory_space<vmem>>, vector<1x96x256xf32>
    %1 = vector.shape_cast %0 : vector<1x96x256xf32> to vector<96x256xf32>
    %2 = arith.truncf %1 : vector<96x256xf32> to vector<96x256xbf16>
    %c0_2 = arith.constant 0 : index
    %c0_3 = arith.constant 0 : index
    %3 = vector.load %arg3[%c0_2, %c0_3] : memref<48x96xbf16, #tpu.memory_space<vmem>>, vector<48x96xbf16>
    %cst = arith.constant dense<0.000000e+00> : vector<48x256xf32>
    %4 = tpu.matmul %3, %2, %cst {dimension_numbers = #tpu.dot_dimension_numbers<[1], [0], [0], [1], [0, 0, 1, 1], [], []>} : vector<48x96xbf16>, vector<96x256xbf16>, vector<48x256xf32> -> vector<48x256xf32>
    %c0_4 = arith.constant 0 : index
    %c0_5 = arith.constant 0 : index
    %5 = vector.load %arg4[%c0_4, %c0_5] : memref<48x1xf32, #tpu.memory_space<vmem>>, vector<48x1xf32>
    %6 = vector.broadcast %5 : vector<48x1xf32> to vector<48x256xf32>
    %7 = arith.addf %4, %6 : vector<48x256xf32>
    %8 = arith.truncf %7 : vector<48x256xf32> to vector<48x256xbf16>
    %c0_6 = arith.constant 0 : index
    %c0_7 = arith.constant 0 : index
    %c0_8 = arith.constant 0 : index
    %9 = vector.load %arg5[%c0_6, %c0_7, %c0_8] : memref<1x48x256xbf16, #tpu.memory_space<vmem>>, vector<1x48x256xbf16>
    %10 = vector.shape_cast %9 : vector<1x48x256xbf16> to vector<48x256xbf16>
    %11 = vector.shape_cast %8 : vector<48x256xbf16> to vector<1x48x256xbf16>
    tpu.vector_store %arg5[%c0_6, %c0_7, %c0_8], %11 {strides = array<i32>} : memref<1x48x256xbf16, #tpu.memory_space<vmem>>, vector<1x48x256xbf16>,
    return
  }
  func.func @transform_0(%arg0: i32, %arg1: i32) -> (i32, i32, i32) {
    %c0_i32 = arith.constant 0 : i32
    %c0_i32_0 = arith.constant 0 : i32
    return %arg0, %c0_i32, %arg1 : i32, i32, i32
  }
  func.func @transform_1(%arg0: i32, %arg1: i32) -> (i32, i32) {
    %c0_i32 = arith.constant 0 : i32
    %c0_i32_0 = arith.constant 0 : i32
    %c0_i32_1 = arith.constant 0 : i32
    return %c0_i32, %c0_i32_0 : i32, i32
  }
  func.func @transform_2(%arg0: i32, %arg1: i32) -> (i32, i32) {
    %c0_i32 = arith.constant 0 : i32
    %c0_i32_0 = arith.constant 0 : i32
    %c0_i32_1 = arith.constant 0 : i32
    return %c0_i32, %c0_i32_0 : i32, i32
  }
  func.func @transform_3(%arg0: i32, %arg1: i32) -> (i32, i32, i32) {
    %c0_i32 = arith.constant 0 : i32
    %c0_i32_0 = arith.constant 0 : i32
    return %arg0, %c0_i32, %arg1 : i32, i32, i32
  }
}

</mosaic_0001>

<llo_original>
// kernel: up_forward.1
$region0: #{up_forward.1}
  #allocation0 [shape = 'u32[]', space=smem, size = 0x4, offset = 0x4, fixed_abs, tag = 'smem constant byte address 0x4 - core index']
  #allocation1 [shape = 'u32[72,128]{1,0:T(1,128)}', space=vmem, size = 0x9000, scoped, tag = 'internal scratch']
  %s0 = inlined_call_operand.vmem [shape: f32[2,96,256], index: 0, kind: input, shape index: {}]
  %s1 = inlined_call_operand.vmem [shape: bf16[48,96], index: 1, kind: input, shape index: {}]
  %s2 = inlined_call_operand.vmem [shape: f32[48,1], index: 2, kind: input, shape index: {}]
  %s3 = inlined_call_operand.vmem [shape: bf16[2,48,256], index: 3, kind: output, shape index: {}]
  %s4 = sld [smem:[#allocation0]]
  $region45: #{up_forward.1} parent=0
    _
  %s6 = ssub.s32 1, %s4
  %s7 = scalar_select 0, %s6, %s4
  loop: start=0, step=1, limit=4
  $region2: #{up_forward.1} parent=0 // loop_pre_header
    _
  $region3: #{up_forward.1} parent=0 // loop_header
    %s9 = sphi 0, %s13
    %p10 = scmp.ge.s32.totalorder %s9, 4
    %s16 = sphi 0, %s28
    %s17 = sphi 0, %s24
    %s18 = sphi 0, %s16
    %s19 = sphi 0, %s17
    %s20 = sphi 0, %s18
    %s21 = sphi 0, %s19
    %s33 = sphi 0, %s35
    %s36 = sphi 0, %s33
    %s37 = sphi 0, %s36
    %s53 = sphi 0, %s37
    %s57 = sphi 0, %s57
    %s59 = sphi 0, %s57
    %s60 = sphi 0, %s59
    %s74 = sphi 0, %s60
    %s78 = sphi 0, %s78
    %s80 = sphi 0, %s78
    %s81 = sphi 0, %s80
    %s95 = sphi 0, %s81
    %s103 = sphi 0, %s105
    %s106 = sphi 0, %s103
    %s107 = sphi 0, %s106
    %s123 = sphi 0, %s107
  $region4: #{up_forward.1} parent=0 // loop_header_branch
    %12 = sbr.rel (%p10) target = $region8
  $region5: #{up_forward.1} parent=0 // loop_body
    %s14 = ssub.s32 %s9, 1
    %s15 = ssub.s32 %s9, 2
    %s22 = sadd.s32 1, %s17
    %p23 = scmp.ge.s32.totalorder %s22, 1
    %s24 = scalar_select %p23, 0, %s22
    %s25 = sadd.s32 1, %s16
    %s26 = scalar_select %p23, %s25, %s16
    %p27 = scmp.ge.s32.totalorder %s26, 2
    %s28 = scalar_select %p27, 0, %s26
    %s29 = ssub.s32 %s16, %s28
    %s30 = ssub.s32 %s17, %s24
    %s31 = sor.u32 %s29, %s30
    %p32 = scmp.eq.s32.totalorder %s31, 0
    %s34 = sadd.s32 %s33, 1
    %s35 = scalar_select %p32, %s33, %s34
    %p38 = pneg %p32
    %p39 = scmp.eq.s32.totalorder %s9, 1
    %p40 = por %p38, %p39
    %p41 = scmp.ne.s32.totalorder %s33, %s36
    %p42 = scmp.eq.s32.totalorder %s9, 0
    %p43 = por %p41, %p42
    %p44 = scmp.ne.s32.totalorder %s33, %s36
    %p45 = scmp.eq.s32.totalorder %s14, 1
    %p46 = por %p44, %p45
    %p47 = scmp.ne.s32.totalorder %s36, %s37
    %p48 = scmp.eq.s32.totalorder %s14, 0
    %p49 = por %p47, %p48
    %p50 = scmp.ne.s32.totalorder %s36, %s37
    %p51 = scmp.eq.s32.totalorder %s15, 1
    %p52 = por %p50, %p51
    %p54 = scmp.ne.s32.totalorder %s37, %s53
    %p55 = scmp.eq.s32.totalorder %s15, 0
    %p56 = por %p54, %p55
    %s58 = sadd.s32 %s57, 1
    %p61 = scmp.eq.s32.totalorder %s9, 1
    %p62 = scmp.ne.s32.totalorder %s57, %s59
    %p63 = scmp.eq.s32.totalorder %s9, 0
    %p64 = por %p62, %p63
    %p65 = scmp.ne.s32.totalorder %s57, %s59
    %p66 = scmp.eq.s32.totalorder %s14, 1
    %p67 = por %p65, %p66
    %p68 = scmp.ne.s32.totalorder %s59, %s60
    %p69 = scmp.eq.s32.totalorder %s14, 0
    %p70 = por %p68, %p69
    %p71 = scmp.ne.s32.totalorder %s59, %s60
    %p72 = scmp.eq.s32.totalorder %s15, 1
    %p73 = por %p71, %p72
    %p75 = scmp.ne.s32.totalorder %s60, %s74
    %p76 = scmp.eq.s32.totalorder %s15, 0
    %p77 = por %p75, %p76
    %s79 = sadd.s32 %s78, 1
    %p82 = scmp.eq.s32.totalorder %s9, 1
    %p83 = scmp.ne.s32.totalorder %s78, %s80
    %p84 = scmp.eq.s32.totalorder %s9, 0
    %p85 = por %p83, %p84
    %p86 = scmp.ne.s32.totalorder %s78, %s80
    %p87 = scmp.eq.s32.totalorder %s14, 1
    %p88 = por %p86, %p87
    %p89 = scmp.ne.s32.totalorder %s80, %s81
    %p90 = scmp.eq.s32.totalorder %s14, 0
    %p91 = por %p89, %p90
    %p92 = scmp.ne.s32.totalorder %s80, %s81
    %p93 = scmp.eq.s32.totalorder %s15, 1
    %p94 = por %p92, %p93
    %p96 = scmp.ne.s32.totalorder %s81, %s95
    %p97 = scmp.eq.s32.totalorder %s15, 0
    %p98 = por %p96, %p97
    %s99 = ssub.s32 %s16, %s28
    %s100 = ssub.s32 %s17, %s24
    %s101 = sor.u32 %s99, %s100
    %p102 = scmp.eq.s32.totalorder %s101, 0
    %s104 = sadd.s32 %s103, 1
    %s105 = scalar_select %p102, %s103, %s104
    %p108 = pneg %p102
    %p109 = scmp.eq.s32.totalorder %s9, 1
    %p110 = por %p108, %p109
    %p111 = scmp.ne.s32.totalorder %s103, %s106
    %p112 = scmp.eq.s32.totalorder %s9, 0
    %p113 = por %p111, %p112
    %p114 = scmp.ne.s32.totalorder %s103, %s106
    %p115 = scmp.eq.s32.totalorder %s14, 1
    %p116 = por %p114, %p115
    %p117 = scmp.ne.s32.totalorder %s106, %s107
    %p118 = scmp.eq.s32.totalorder %s14, 0
    %p119 = por %p117, %p118
    %p120 = scmp.ne.s32.totalorder %s106, %s107
    %p121 = scmp.eq.s32.totalorder %s15, 1
    %p122 = por %p120, %p121
    %p124 = scmp.ne.s32.totalorder %s107, %s123
    %p125 = scmp.eq.s32.totalorder %s15, 0
    %p126 = por %p124, %p125
    %p127 = scmp.le.s32.totalorder 1, %s9
    %p128 = scmp.lt.s32.totalorder %s9, 3
    %p129 = pnand %p127, %p128
    %p130 = pneg %p129
    // Predicated region
    $region9: #{up_forward.1} parent=5 // pred_check
      _
    $region10: #{up_forward.1} parent=5 // pred_check_branch
      %132 = sbr.rel (%p129) target = $region12
    $region11: #{up_forward.1} parent=5 // pred_region
      %s133 = ssub.s32 %s9, 1
      // Predicated region
      $region13: #{up_forward.1} parent=11 // pred_check
        %p134 = pneg %p70
      $region14: #{up_forward.1} parent=11 // pred_check_branch
        %136 = sbr.rel (%p134) target = $region16
      $region15: #{up_forward.1} parent=11 // pred_region
        _
      $region16: #{up_forward.1} parent=11 // pred_fallthru
        _
      // Predicated region
      $region17: #{up_forward.1} parent=11 // pred_check
        %p137 = pneg %p91
      $region18: #{up_forward.1} parent=11 // pred_check_branch
        %139 = sbr.rel (%p137) target = $region20
      $region19: #{up_forward.1} parent=11 // pred_region
        _
      $region20: #{up_forward.1} parent=11 // pred_fallthru
        _
    $region12: #{up_forward.1} parent=5 // pred_fallthru
      _
    %p140 = scmp.lt.s32.totalorder %s9, 2
    // Predicated region
    $region21: #{up_forward.1} parent=5 // pred_check
      %p141 = pneg %p140
    $region22: #{up_forward.1} parent=5 // pred_check_branch
      %143 = sbr.rel (%p141) target = $region24
    $region23: #{up_forward.1} parent=5 // pred_region
      // Predicated region
      $region25: #{up_forward.1} parent=23 // pred_check
        %p144 = pneg %p43
      $region26: #{up_forward.1} parent=23 // pred_check_branch
        %146 = sbr.rel (%p144) target = $region28
      $region27: #{up_forward.1} parent=23 // pred_region
        %s147 = smul.u32 2, %s17
        %p148 = scmp.lt.s32.totalorder %s16, 1
        %s149 = scalar_select %p148, %s16, 1
        %p150 = scmp.lt.s32.totalorder %s147, 1
        %s151 = scalar_select %p150, %s147, 1
        %s152 = smul.addr %s149, 24
        %s153 = sadd.s32 %s151, %s152
        %s154 = smul.addr %s153, 8
        %s155 = scalar_lea.vmem %s0, %s154
        %s156 = smul.u32 2, %s17
      $region28: #{up_forward.1} parent=23 // pred_fallthru
        _
    $region24: #{up_forward.1} parent=5 // pred_fallthru
      _
    %p157 = scmp.le.s32.totalorder 1, %s9
    %p158 = scmp.lt.s32.totalorder %s9, 3
    %p159 = pnand %p157, %p158
    %p160 = pneg %p159
    // Predicated region
    $region29: #{up_forward.1} parent=5 // pred_check
      _
    $region30: #{up_forward.1} parent=5 // pred_check_branch
      %162 = sbr.rel (%p159) target = $region32
    $region31: #{up_forward.1} parent=5 // pred_region
      %s163 = ssub.s32 %s9, 1
      %s164 = smul.u32 2, %s19
      %p165 = scmp.lt.s32.totalorder %s18, 1
      %s166 = scalar_select %p165, %s18, 1
      %p167 = scmp.lt.s32.totalorder %s164, 1
      %s168 = scalar_select %p167, %s164, 1
      %s169 = smul.addr %s166, 24
      %s170 = sadd.s32 %s168, %s169
      %s171 = smul.addr %s170, 8
      %s172 = scalar_lea.vmem %s0, %s171
      %p173 = pneg %p49
      %p174 = pneg %p46
      %p175 = pneg %p70
      %p176 = pneg %p67
      %p177 = pneg %p91
      %p178 = pneg %p88
      %p179 = pneg %p119
      %p180 = pneg %p116
      %s181 = smul.u32 2, %s19
      %p182 = scmp.lt.s32.totalorder %s18, 1
      %s183 = scalar_select %p182, %s18, 1
      %p184 = scmp.lt.s32.totalorder %s181, 1
      %s185 = scalar_select %p184, %s181, 1
      %s186 = smul.addr %s183, 12
      %s187 = sadd.s32 %s185, %s186
      %s188 = smul.addr %s187, 4
      %s189 = scalar_lea.vmem %s3, %s188
      %s190 = smul.u32 2, %s19
      %p191 = scmp.lt.s32.totalorder %s18, 1
      %s192 = scalar_select %p191, %s18, 1
      %p193 = scmp.lt.s32.totalorder %s190, 1
      %s194 = scalar_select %p193, %s190, 1
      %s195 = smul.addr %s192, 24
      %s196 = sadd.s32 %s194, %s195
      %s197 = smul.addr %s196, 8
      %s198 = scalar_lea.vmem %s0, %s197
      %s199 = smul.u32 2, %s19
      %s200 = smul.u32 2, %s19
      %p201 = scmp.lt.s32.totalorder %s18, 1
      %s202 = scalar_select %p201, %s18, 1
      %p203 = scmp.lt.s32.totalorder %s200, 1
      %s204 = scalar_select %p203, %s200, 1
      %s205 = smul.addr %s202, 12
      %s206 = sadd.s32 %s204, %s205
      %s207 = smul.addr %s206, 4
      %s208 = scalar_lea.vmem %s3, %s207
      %s209 = smul.u32 2, %s19
      %v211 = vld [vmem:[%s198] sm:$0xff]
      %v212 = vld [vmem:[%s198 + $0x8] sm:$0xff]
      %v213 = vld [vmem:[%s198 + $0x10] sm:$0xff]
      %v214 = vld [vmem:[%s198 + $0x18] sm:$0xff]
      %v215 = vld [vmem:[%s198 + $0x20] sm:$0xff]
      %v216 = vld [vmem:[%s198 + $0x28] sm:$0xff]
      %v217 = vld [vmem:[%s198 + $0x30] sm:$0xff]
      %v218 = vld [vmem:[%s198 + $0x38] sm:$0xff]
      %v219 = vld [vmem:[%s198 + $0x40] sm:$0xff]
      %v220 = vld [vmem:[%s198 + $0x48] sm:$0xff]
      %v221 = vld [vmem:[%s198 + $0x50] sm:$0xff]
      %v222 = vld [vmem:[%s198 + $0x58] sm:$0xff]
      %v223 = vld [vmem:[%s198 + $0x60] sm:$0xff]
      %v224 = vld [vmem:[%s198 + $0x68] sm:$0xff]
      %v225 = vld [vmem:[%s198 + $0x70] sm:$0xff]
      %v226 = vld [vmem:[%s198 + $0x78] sm:$0xff]
      %v227 = vld [vmem:[%s198 + $0x80] sm:$0xff]
      %v228 = vld [vmem:[%s198 + $0x88] sm:$0xff]
      %v229 = vld [vmem:[%s198 + $0x90] sm:$0xff]
      %v230 = vld [vmem:[%s198 + $0x98] sm:$0xff]
      %v231 = vld [vmem:[%s198 + $0xa0] sm:$0xff]
      %v232 = vld [vmem:[%s198 + $0xa8] sm:$0xff]
      %v233 = vld [vmem:[%s198 + $0xb0] sm:$0xff]
      %v234 = vld [vmem:[%s198 + $0xb8] sm:$0xff]
      %v235 = vpack.c.bf16 %v213, %v211
      %v236 = vpack.c.bf16 %v214, %v212
      %v237 = vpack.c.bf16 %v217, %v215
      %v238 = vpack.c.bf16 %v218, %v216
      %v239 = vpack.c.bf16 %v221, %v219
      %v240 = vpack.c.bf16 %v222, %v220
      %v241 = vpack.c.bf16 %v225, %v223
      %v242 = vpack.c.bf16 %v226, %v224
      %v243 = vpack.c.bf16 %v229, %v227
      %v244 = vpack.c.bf16 %v230, %v228
      %v245 = vpack.c.bf16 %v233, %v231
      %v246 = vpack.c.bf16 %v234, %v232
      %v247 = vld [vmem:[%s1] sm:$0xf]
      %v248 = vld [vmem:[%s1 + $0x4] sm:$0xf]
      %v249 = vld [vmem:[%s1 + $0x8] sm:$0xf]
      %v250 = vld [vmem:[%s1 + $0xc] sm:$0xf]
      %v251 = vld [vmem:[%s1 + $0x10] sm:$0xf]
      %v252 = vld [vmem:[%s1 + $0x14] sm:$0xf]
      %v253 = vld [vmem:[%s2] sm:$0xff]
      %v254 = vld [vmem:[%s2 + $0x8] sm:$0xff]
      %v255 = vld [vmem:[%s2 + $0x10] sm:$0xff]
      %v256 = vld [vmem:[%s2 + $0x18] sm:$0xff]
      %v257 = vld [vmem:[%s2 + $0x20] sm:$0xff]
      %v258 = vld [vmem:[%s2 + $0x28] sm:$0xff]
      %260 = vset.pattern.permute.xlu0 0
      %261 = vperm.xlu0 %260, %v253
      %v262 = vpop.permute.xlu0 %261
      %265 = vset.pattern.permute.xlu0 0
      %266 = vperm.xlu0 %265, %v254
      %v267 = vpop.permute.xlu0 %266
      %270 = vset.pattern.permute.xlu0 0
      %271 = vperm.xlu0 %270, %v255
      %v272 = vpop.permute.xlu0 %271
      %275 = vset.pattern.permute.xlu0 0
      %276 = vperm.xlu0 %275, %v256
      %v277 = vpop.permute.xlu0 %276
      %280 = vset.pattern.permute.xlu0 0
      %281 = vperm.xlu0 %280, %v257
      %v282 = vpop.permute.xlu0 %281
      %285 = vset.pattern.permute.xlu0 0
      %286 = vperm.xlu0 %285, %v258
      %v287 = vpop.permute.xlu0 %286
      %v295 = vunpack.c.l.b16 %v247
      %v296 = vunpack.c.l.b16 %v248
      %v297 = vunpack.c.l.b16 %v249
      %v298 = vunpack.c.l.b16 %v250
      %v299 = vunpack.c.l.b16 %v251
      %v300 = vunpack.c.l.b16 %v252
      %v301 = vpack.c.b16 %v296, %v295
      %v302 = vpack.c.b16 %v298, %v297
      %v303 = vpack.c.b16 %v300, %v299
      %vm304 = vcmask 785408
      %v306 = vsel %vm304, %v301, 0
      %v309 = vsel %vm304, %v302, 0
      %v312 = vsel %vm304, %v303, 0
      %314 = vmatpush.bf16.msra.mxu0 0
      %315 = vmatpush.bf16.msra.mxu0 0
      %316 = vmatpush.bf16.msra.mxu0 %v245
      %317 = vmatpush.bf16.msra.mxu0 %v243
      %318 = vmatpush.bf16.msra.mxu0 %v241
      %319 = vmatpush.bf16.msra.mxu0 %v239
      %320 = vmatpush.bf16.msra.mxu0 %v237
      %321 = vmatpush.bf16.msra.mxu0 %v235
      %322 = vmatmul.bf16.gmra.mxu0 %v306
      %v323 = vpop.f32.mrf.mxu0
      %v324 = vadd.f32 %v262, %v323
      %v325 = vpop.f32.mrf.mxu0
      %v326 = vadd.f32 %v267, %v325
      %327 = vmatmul.bf16.gmra.mxu0 %v309
      %v328 = vpop.f32.mrf.mxu0
      %v329 = vadd.f32 %v272, %v328
      %v330 = vpop.f32.mrf.mxu0
      %v331 = vadd.f32 %v277, %v330
      %332 = vmatmul.bf16.gmra.mxu0 %v312
      %v333 = vpop.f32.mrf.mxu0
      %v334 = vadd.f32 %v282, %v333
      %v335 = vpop.f32.mrf.mxu0
      %v336 = vadd.f32 %v287, %v335
      %337 = vdwg.mxu0
      %338 = vmatpush.bf16.msra.mxu0 0
      %339 = vmatpush.bf16.msra.mxu0 0
      %340 = vmatpush.bf16.msra.mxu0 %v246
      %341 = vmatpush.bf16.msra.mxu0 %v244
      %342 = vmatpush.bf16.msra.mxu0 %v242
      %343 = vmatpush.bf16.msra.mxu0 %v240
      %344 = vmatpush.bf16.msra.mxu0 %v238
      %345 = vmatpush.bf16.msra.mxu0 %v236
      %346 = vmatmul.bf16.gmra.mxu0 %v306
      %v347 = vpop.f32.mrf.mxu0
      %v348 = vadd.f32 %v262, %v347
      %v349 = vpop.f32.mrf.mxu0
      %v350 = vadd.f32 %v267, %v349
      %351 = vmatmul.bf16.gmra.mxu0 %v309
      %v352 = vpop.f32.mrf.mxu0
      %v353 = vadd.f32 %v272, %v352
      %v354 = vpop.f32.mrf.mxu0
      %v355 = vadd.f32 %v277, %v354
      %356 = vmatmul.bf16.gmra.mxu0 %v312
      %v357 = vpop.f32.mrf.mxu0
      %v358 = vadd.f32 %v282, %v357
      %v359 = vpop.f32.mrf.mxu0
      %v360 = vadd.f32 %v287, %v359
      %361 = vdwg.mxu0
      %v362 = vpack.c.bf16 %v348, %v324
      %v363 = vpack.c.bf16 %v350, %v326
      %v364 = vpack.c.bf16 %v353, %v329
      %v365 = vpack.c.bf16 %v355, %v331
      %v366 = vpack.c.bf16 %v358, %v334
      %v367 = vpack.c.bf16 %v360, %v336
      %368 = vst [vmem:[%s208] sm:$0xff] %v362
      %369 = vst [vmem:[%s208 + $0x8] sm:$0xff] %v363
      %370 = vst [vmem:[%s208 + $0x10] sm:$0xff] %v364
      %371 = vst [vmem:[%s208 + $0x18] sm:$0xff] %v365
      %372 = vst [vmem:[%s208 + $0x20] sm:$0xff] %v366
      %373 = vst [vmem:[%s208 + $0x28] sm:$0xff] %v367
      %s374 = smul.u32 2, %s19
      %p375 = scmp.lt.s32.totalorder %s18, 1
      %s376 = scalar_select %p375, %s18, 1
      %p377 = scmp.lt.s32.totalorder %s374, 1
      %s378 = scalar_select %p377, %s374, 1
      %s379 = smul.addr %s376, 12
      %s380 = sadd.s32 %s378, %s379
      %s381 = smul.addr %s380, 4
      %s382 = scalar_lea.vmem %s3, %s381
      // Predicated region
      $region33: #{up_forward.1} parent=31 // pred_check
        %p383 = pneg %p116
      $region34: #{up_forward.1} parent=31 // pred_check_branch
        %385 = sbr.rel (%p383) target = $region36
      $region35: #{up_forward.1} parent=31 // pred_region
        %s386 = smul.u32 2, %s19
      $region36: #{up_forward.1} parent=31 // pred_fallthru
        _
    $region32: #{up_forward.1} parent=5 // pred_fallthru
      _
    %p387 = scmp.le.s32.totalorder 2, %s9
    // Predicated region
    $region37: #{up_forward.1} parent=5 // pred_check
      %p388 = pneg %p387
    $region38: #{up_forward.1} parent=5 // pred_check_branch
      %390 = sbr.rel (%p388) target = $region40
    $region39: #{up_forward.1} parent=5 // pred_region
      %s391 = ssub.s32 %s9, 2
      // Predicated region
      $region41: #{up_forward.1} parent=39 // pred_check
        %p392 = pneg %p122
      $region42: #{up_forward.1} parent=39 // pred_check_branch
        %394 = sbr.rel (%p392) target = $region44
      $region43: #{up_forward.1} parent=39 // pred_region
        %s395 = smul.u32 2, %s21
        %p396 = scmp.lt.s32.totalorder %s20, 1
        %s397 = scalar_select %p396, %s20, 1
        %p398 = scmp.lt.s32.totalorder %s395, 1
        %s399 = scalar_select %p398, %s395, 1
        %s400 = smul.addr %s397, 12
        %s401 = sadd.s32 %s399, %s400
        %s402 = smul.addr %s401, 4
        %s403 = scalar_lea.vmem %s3, %s402
      $region44: #{up_forward.1} parent=39 // pred_fallthru
        _
    $region40: #{up_forward.1} parent=5 // pred_fallthru
      _
  $region6: #{up_forward.1} parent=0 // loop_footer
    %s13 = sadd.s32 1, %s9
  $region7: #{up_forward.1} parent=0 // loop_footer_branch
    %8 = sbr.rel target = $region3
  $region8: #{up_forward.1} parent=0 // loop_exit
    _

</llo_original>
